<compile_context>
chip_gen: v5e
topology: v5e:2x2
jax: 0.10.0
libtpu: 0.0.40
codegen_flags: <defaults>
</compile_context>

<pallas_src>
import jax
import jax.numpy as jnp
import numpy as np
from jax.experimental import pallas as pl
from jax.experimental.pallas import tpu as pltpu


def _make_kernel(ts: int):
    """Build the kernel for a tile of `ts` tokens (ts is static)."""

    def kernel(x_ids,      # SMEM scalar-prefetch: (B, S) int32 token ids
               seg_ids,    # SMEM scalar-prefetch: (B, S) int32 segment ids
               tok_hbm,    # (V, D) f32 token table, HBM-resident (pl.ANY)
               pos_ref,    # (ts, D) f32 positional rows for this tile (auto-DMA)
               segw_ref,   # (NS, D) f32 segment table (tiny, VMEM)
               out_ref,    # (ts, D) f32 output tile
               tok_buf,    # VMEM scratch (ts, D) — gathered token rows
               sems):      # (ts,) DMA semaphores
        b = pl.program_id(0)
        s0 = pl.program_id(1) * ts

        # 1) Issue all row gathers for this tile; they run concurrently.
        for i in range(ts):
            tid = x_ids[b, s0 + i]
            pltpu.make_async_copy(
                tok_hbm.at[pl.ds(tid, 1), :],
                tok_buf.at[pl.ds(i, 1), :],
                sems.at[i],
            ).start()

        # 2) Wait for all gathers (wait only needs dst shape + semaphore).
        for i in range(ts):
            pltpu.make_async_copy(
                tok_hbm.at[pl.ds(0, 1), :],
                tok_buf.at[pl.ds(i, 1), :],
                sems.at[i],
            ).wait()

        # 3) Token + positional embedding, vectorized over the whole tile.
        base = tok_buf[...] + pos_ref[...]

        # 4) Segment embedding: per-row VPU add of the dynamically selected
        #    segment row (NS is tiny; no MXU involved).
        for i in range(ts):
            sid = seg_ids[b, s0 + i]
            out_ref[i, :] = base[i, :] + segw_ref[sid, :]

    return kernel


def embedding_bert(x, seg, tok_w, pos_w, seg_w, *, tile_tokens=None):
    B, S = x.shape
    V, D = tok_w.shape
    M = pos_w.shape[0]
    NS = seg_w.shape[0]
    if S > M:
        raise ValueError("sequence length exceeds maxlen of the positional table")
    if tile_tokens is None:
        tile_tokens = S if S <= 128 else 128
    ts = int(tile_tokens)
    if S % ts != 0:
        raise ValueError("S must be divisible by tile_tokens")

    grid = (B, S // ts)
    kernel = _make_kernel(ts)

    return pl.pallas_call(
        kernel,
        out_shape=jax.ShapeDtypeStruct((B, S, D), tok_w.dtype),
        grid_spec=pltpu.PrefetchScalarGridSpec(
            num_scalar_prefetch=2,          # x ids, seg ids -> SMEM
            grid=grid,
            in_specs=[
                # Token table stays in HBM; rows are gathered manually.
                pl.BlockSpec(memory_space=pl.ANY),
                # Positional rows for this sequence tile (pure slice, no lookup).
                pl.BlockSpec((ts, D), lambda b, sj, xr, sr: (sj, 0)),
                # Tiny segment table, VMEM-resident (constant block).
                pl.BlockSpec((NS, D), lambda b, sj, xr, sr: (0, 0)),
            ],
            out_specs=pl.BlockSpec((None, ts, D),
                                   lambda b, sj, xr, sr: (b, sj, 0)),
            scratch_shapes=[
                pltpu.VMEM((ts, D), tok_w.dtype),
                pltpu.SemaphoreType.DMA((ts,)),
            ],
        ),
        compiler_params=pltpu.CompilerParams(
            dimension_semantics=("parallel", "parallel")),
    )(x.astype(jnp.int32), seg.astype(jnp.int32), tok_w, pos_w, seg_w)


if __name__ == "__main__":
    # Small shapes consistent with the module.
    vocab_size = 64
    d_model = 128          # multiple of 128 -> lane-dense output stores
    maxlen = 16
    n_segments = 2
    B, S = 2, 16

    key = jax.random.PRNGKey(0)
    k_tok, k_pos, k_seg, k_x, k_s = jax.random.split(key, 5)

    # nn.Embedding default init ~ N(0, 1)
    tok_w = jax.random.normal(k_tok, (vocab_size, d_model), dtype=jnp.float32)
    pos_w = jax.random.normal(k_pos, (maxlen, d_model), dtype=jnp.float32)
    seg_w = jax.random.normal(k_seg, (n_segments, d_model), dtype=jnp.float32)

    x = jax.random.randint(k_x, (B, S), 0, vocab_size, dtype=jnp.int32)
    seg = jax.random.randint(k_s, (B, S), 0, n_segments, dtype=jnp.int32)

    out = embedding_bert(x, seg, tok_w, pos_w, seg_w, tile_tokens=8)
    out = jax.block_until_ready(out)

    # Pure-JAX reference (same semantics as the PyTorch forward) — exact match
    # expected since the kernel is a true gather + adds (no matmuls).
    pos_ids = jnp.broadcast_to(jnp.arange(S, dtype=jnp.int32)[None, :], (B, S))
    ref = tok_w[x] + pos_w[pos_ids] + seg_w[seg]
    np.testing.assert_allclose(np.asarray(out), np.asarray(ref),
                               rtol=1e-6, atol=1e-6)

    print("KERNEL_OK")
</pallas_src>

<mosaic_0001>
module attributes {stable_mosaic.version = 11 : i64} {
  func.func @kernel(%arg0: i32, %arg1: i32, %arg2: memref<2x16xi32, #tpu.memory_space<smem>>, %arg3: memref<2x16xi32, #tpu.memory_space<smem>>, %arg4: memref<64x128xf32, #tpu.memory_space<any>>, %arg5: memref<8x128xf32, #tpu.memory_space<vmem>>, %arg6: memref<2x128xf32, #tpu.memory_space<vmem>>, %arg7: memref<1x8x128xf32, #tpu.memory_space<vmem>>, %arg8: memref<8x128xf32, #tpu.memory_space<vmem>>, %arg9: memref<8x!tpu.dma_semaphore, #tpu.memory_space<semaphore_mem>>) attributes {dimension_semantics = [#tpu.dimension_semantics<parallel>, #tpu.dimension_semantics<parallel>], iteration_bounds = array<i64: 2, 2>, scalar_prefetch = 2 : i64, scratch_operands = 2 : i64, tpu.core_type = #tpu.core_type<tc>, window_params = [{}, {transform_indices = @transform_1, window_bounds = array<i64: 8, 128>}, {pipeline_mode = #tpu.pipeline_mode<synchronous>, transform_indices = @transform_2, window_bounds = array<i64: 2, 128>}, {transform_indices = @transform_3, window_bounds = array<i64: 1, 8, 128>}]} {
    %c8_i32 = arith.constant 8 : i32
    %0 = arith.muli %arg1, %c8_i32 : i32
    %c0_i32 = arith.constant 0 : i32
    %1 = arith.addi %0, %c0_i32 : i32
    %2 = arith.index_cast %arg0 : i32 to index
    %3 = arith.index_cast %1 : i32 to index
    %4 = memref.load %arg2[%2, %3] : memref<2x16xi32, #tpu.memory_space<smem>>
    %c0_i32_0 = arith.constant 0 : i32
    %c0_i32_1 = arith.constant 0 : i32
    %5 = tpu.memref_slice %arg4[%4, %c0_i32_1] : memref<64x128xf32, #tpu.memory_space<any>> -> memref<1x128xf32, #tpu.memory_space<any>>
    %c0_i32_2 = arith.constant 0 : i32
    %c0_i32_3 = arith.constant 0 : i32
    %6 = tpu.memref_slice %arg8[%c0_i32_2, %c0_i32_3] : memref<8x128xf32, #tpu.memory_space<vmem>> -> memref<1x128xf32, #tpu.memory_space<vmem>>
    %7 = tpu.memref_slice %arg9[%c0_i32_0] : memref<8x!tpu.dma_semaphore, #tpu.memory_space<semaphore_mem>> -> memref<1x!tpu.dma_semaphore, #tpu.memory_space<semaphore_mem>>
    %8 = tpu.memref_squeeze %7 : memref<1x!tpu.dma_semaphore, #tpu.memory_space<semaphore_mem>> -> memref<!tpu.dma_semaphore, #tpu.memory_space<semaphore_mem>>
    tpu.enqueue_dma source(%5 : memref<1x128xf32, #tpu.memory_space<any>>) target(%6 : memref<1x128xf32, #tpu.memory_space<vmem>>) target_semaphore(%8 : memref<!tpu.dma_semaphore, #tpu.memory_space<semaphore_mem>>)
    %c1_i32 = arith.constant 1 : i32
    %9 = arith.addi %0, %c1_i32 : i32
    %10 = arith.index_cast %arg0 : i32 to index
    %11 = arith.index_cast %9 : i32 to index
    %12 = memref.load %arg2[%10, %11] : memref<2x16xi32, #tpu.memory_space<smem>>
    %c1_i32_4 = arith.constant 1 : i32
    %c0_i32_5 = arith.constant 0 : i32
    %13 = tpu.memref_slice %arg4[%12, %c0_i32_5] : memref<64x128xf32, #tpu.memory_space<any>> -> memref<1x128xf32, #tpu.memory_space<any>>
    %c1_i32_6 = arith.constant 1 : i32
    %c0_i32_7 = arith.constant 0 : i32
    %14 = tpu.memref_slice %arg8[%c1_i32_6, %c0_i32_7] : memref<8x128xf32, #tpu.memory_space<vmem>> -> memref<1x128xf32, #tpu.memory_space<vmem>>
    %15 = tpu.memref_slice %arg9[%c1_i32_4] : memref<8x!tpu.dma_semaphore, #tpu.memory_space<semaphore_mem>> -> memref<1x!tpu.dma_semaphore, #tpu.memory_space<semaphore_mem>>
    %16 = tpu.memref_squeeze %15 : memref<1x!tpu.dma_semaphore, #tpu.memory_space<semaphore_mem>> -> memref<!tpu.dma_semaphore, #tpu.memory_space<semaphore_mem>>
    tpu.enqueue_dma source(%13 : memref<1x128xf32, #tpu.memory_space<any>>) target(%14 : memref<1x128xf32, #tpu.memory_space<vmem>>) target_semaphore(%16 : memref<!tpu.dma_semaphore, #tpu.memory_space<semaphore_mem>>)
    %c2_i32 = arith.constant 2 : i32
    %17 = arith.addi %0, %c2_i32 : i32
    %18 = arith.index_cast %arg0 : i32 to index
    %19 = arith.index_cast %17 : i32 to index
    %20 = memref.load %arg2[%18, %19] : memref<2x16xi32, #tpu.memory_space<smem>>
    %c2_i32_8 = arith.constant 2 : i32
    %c0_i32_9 = arith.constant 0 : i32
    %21 = tpu.memref_slice %arg4[%20, %c0_i32_9] : memref<64x128xf32, #tpu.memory_space<any>> -> memref<1x128xf32, #tpu.memory_space<any>>
    %c2_i32_10 = arith.constant 2 : i32
    %c0_i32_11 = arith.constant 0 : i32
    %22 = tpu.memref_slice %arg8[%c2_i32_10, %c0_i32_11] : memref<8x128xf32, #tpu.memory_space<vmem>> -> memref<1x128xf32, #tpu.memory_space<vmem>>
    %23 = tpu.memref_slice %arg9[%c2_i32_8] : memref<8x!tpu.dma_semaphore, #tpu.memory_space<semaphore_mem>> -> memref<1x!tpu.dma_semaphore, #tpu.memory_space<semaphore_mem>>
    %24 = tpu.memref_squeeze %23 : memref<1x!tpu.dma_semaphore, #tpu.memory_space<semaphore_mem>> -> memref<!tpu.dma_semaphore, #tpu.memory_space<semaphore_mem>>
    tpu.enqueue_dma source(%21 : memref<1x128xf32, #tpu.memory_space<any>>) target(%22 : memref<1x128xf32, #tpu.memory_space<vmem>>) target_semaphore(%24 : memref<!tpu.dma_semaphore, #tpu.memory_space<semaphore_mem>>)
    %c3_i32 = arith.constant 3 : i32
    %25 = arith.addi %0, %c3_i32 : i32
    %26 = arith.index_cast %arg0 : i32 to index
    %27 = arith.index_cast %25 : i32 to index
    %28 = memref.load %arg2[%26, %27] : memref<2x16xi32, #tpu.memory_space<smem>>
    %c3_i32_12 = arith.constant 3 : i32
    %c0_i32_13 = arith.constant 0 : i32
    %29 = tpu.memref_slice %arg4[%28, %c0_i32_13] : memref<64x128xf32, #tpu.memory_space<any>> -> memref<1x128xf32, #tpu.memory_space<any>>
    %c3_i32_14 = arith.constant 3 : i32
    %c0_i32_15 = arith.constant 0 : i32
    %30 = tpu.memref_slice %arg8[%c3_i32_14, %c0_i32_15] : memref<8x128xf32, #tpu.memory_space<vmem>> -> memref<1x128xf32, #tpu.memory_space<vmem>>
    %31 = tpu.memref_slice %arg9[%c3_i32_12] : memref<8x!tpu.dma_semaphore, #tpu.memory_space<semaphore_mem>> -> memref<1x!tpu.dma_semaphore, #tpu.memory_space<semaphore_mem>>
    %32 = tpu.memref_squeeze %31 : memref<1x!tpu.dma_semaphore, #tpu.memory_space<semaphore_mem>> -> memref<!tpu.dma_semaphore, #tpu.memory_space<semaphore_mem>>
    tpu.enqueue_dma source(%29 : memref<1x128xf32, #tpu.memory_space<any>>) target(%30 : memref<1x128xf32, #tpu.memory_space<vmem>>) target_semaphore(%32 : memref<!tpu.dma_semaphore, #tpu.memory_space<semaphore_mem>>)
    %c4_i32 = arith.constant 4 : i32
    %33 = arith.addi %0, %c4_i32 : i32
    %34 = arith.index_cast %arg0 : i32 to index
    %35 = arith.index_cast %33 : i32 to index
    %36 = memref.load %arg2[%34, %35] : memref<2x16xi32, #tpu.memory_space<smem>>
    %c4_i32_16 = arith.constant 4 : i32
    %c0_i32_17 = arith.constant 0 : i32
    %37 = tpu.memref_slice %arg4[%36, %c0_i32_17] : memref<64x128xf32, #tpu.memory_space<any>> -> memref<1x128xf32, #tpu.memory_space<any>>
    %c4_i32_18 = arith.constant 4 : i32
    %c0_i32_19 = arith.constant 0 : i32
    %38 = tpu.memref_slice %arg8[%c4_i32_18, %c0_i32_19] : memref<8x128xf32, #tpu.memory_space<vmem>> -> memref<1x128xf32, #tpu.memory_space<vmem>>
    %39 = tpu.memref_slice %arg9[%c4_i32_16] : memref<8x!tpu.dma_semaphore, #tpu.memory_space<semaphore_mem>> -> memref<1x!tpu.dma_semaphore, #tpu.memory_space<semaphore_mem>>
    %40 = tpu.memref_squeeze %39 : memref<1x!tpu.dma_semaphore, #tpu.memory_space<semaphore_mem>> -> memref<!tpu.dma_semaphore, #tpu.memory_space<semaphore_mem>>
    tpu.enqueue_dma source(%37 : memref<1x128xf32, #tpu.memory_space<any>>) target(%38 : memref<1x128xf32, #tpu.memory_space<vmem>>) target_semaphore(%40 : memref<!tpu.dma_semaphore, #tpu.memory_space<semaphore_mem>>)
    %c5_i32 = arith.constant 5 : i32
    %41 = arith.addi %0, %c5_i32 : i32
    %42 = arith.index_cast %arg0 : i32 to index
    %43 = arith.index_cast %41 : i32 to index
    %44 = memref.load %arg2[%42, %43] : memref<2x16xi32, #tpu.memory_space<smem>>
    %c5_i32_20 = arith.constant 5 : i32
    %c0_i32_21 = arith.constant 0 : i32
    %45 = tpu.memref_slice %arg4[%44, %c0_i32_21] : memref<64x128xf32, #tpu.memory_space<any>> -> memref<1x128xf32, #tpu.memory_space<any>>
    %c5_i32_22 = arith.constant 5 : i32
    %c0_i32_23 = arith.constant 0 : i32
    %46 = tpu.memref_slice %arg8[%c5_i32_22, %c0_i32_23] : memref<8x128xf32, #tpu.memory_space<vmem>> -> memref<1x128xf32, #tpu.memory_space<vmem>>
    %47 = tpu.memref_slice %arg9[%c5_i32_20] : memref<8x!tpu.dma_semaphore, #tpu.memory_space<semaphore_mem>> -> memref<1x!tpu.dma_semaphore, #tpu.memory_space<semaphore_mem>>
    %48 = tpu.memref_squeeze %47 : memref<1x!tpu.dma_semaphore, #tpu.memory_space<semaphore_mem>> -> memref<!tpu.dma_semaphore, #tpu.memory_space<semaphore_mem>>
    tpu.enqueue_dma source(%45 : memref<1x128xf32, #tpu.memory_space<any>>) target(%46 : memref<1x128xf32, #tpu.memory_space<vmem>>) target_semaphore(%48 : memref<!tpu.dma_semaphore, #tpu.memory_space<semaphore_mem>>)
    %c6_i32 = arith.constant 6 : i32
    %49 = arith.addi %0, %c6_i32 : i32
    %50 = arith.index_cast %arg0 : i32 to index
    %51 = arith.index_cast %49 : i32 to index
    %52 = memref.load %arg2[%50, %51] : memref<2x16xi32, #tpu.memory_space<smem>>
    %c6_i32_24 = arith.constant 6 : i32
    %c0_i32_25 = arith.constant 0 : i32
    %53 = tpu.memref_slice %arg4[%52, %c0_i32_25] : memref<64x128xf32, #tpu.memory_space<any>> -> memref<1x128xf32, #tpu.memory_space<any>>
    %c6_i32_26 = arith.constant 6 : i32
    %c0_i32_27 = arith.constant 0 : i32
    %54 = tpu.memref_slice %arg8[%c6_i32_26, %c0_i32_27] : memref<8x128xf32, #tpu.memory_space<vmem>> -> memref<1x128xf32, #tpu.memory_space<vmem>>
    %55 = tpu.memref_slice %arg9[%c6_i32_24] : memref<8x!tpu.dma_semaphore, #tpu.memory_space<semaphore_mem>> -> memref<1x!tpu.dma_semaphore, #tpu.memory_space<semaphore_mem>>
    %56 = tpu.memref_squeeze %55 : memref<1x!tpu.dma_semaphore, #tpu.memory_space<semaphore_mem>> -> memref<!tpu.dma_semaphore, #tpu.memory_space<semaphore_mem>>
    tpu.enqueue_dma source(%53 : memref<1x128xf32, #tpu.memory_space<any>>) target(%54 : memref<1x128xf32, #tpu.memory_space<vmem>>) target_semaphore(%56 : memref<!tpu.dma_semaphore, #tpu.memory_space<semaphore_mem>>)
    %c7_i32 = arith.constant 7 : i32
    %57 = arith.addi %0, %c7_i32 : i32
    %58 = arith.index_cast %arg0 : i32 to index
    %59 = arith.index_cast %57 : i32 to index
    %60 = memref.load %arg2[%58, %59] : memref<2x16xi32, #tpu.memory_space<smem>>
    %c7_i32_28 = arith.constant 7 : i32
    %c0_i32_29 = arith.constant 0 : i32
    %61 = tpu.memref_slice %arg4[%60, %c0_i32_29] : memref<64x128xf32, #tpu.memory_space<any>> -> memref<1x128xf32, #tpu.memory_space<any>>
    %c7_i32_30 = arith.constant 7 : i32
    %c0_i32_31 = arith.constant 0 : i32
    %62 = tpu.memref_slice %arg8[%c7_i32_30, %c0_i32_31] : memref<8x128xf32, #tpu.memory_space<vmem>> -> memref<1x128xf32, #tpu.memory_space<vmem>>
    %63 = tpu.memref_slice %arg9[%c7_i32_28] : memref<8x!tpu.dma_semaphore, #tpu.memory_space<semaphore_mem>> -> memref<1x!tpu.dma_semaphore, #tpu.memory_space<semaphore_mem>>
    %64 = tpu.memref_squeeze %63 : memref<1x!tpu.dma_semaphore, #tpu.memory_space<semaphore_mem>> -> memref<!tpu.dma_semaphore, #tpu.memory_space<semaphore_mem>>
    tpu.enqueue_dma source(%61 : memref<1x128xf32, #tpu.memory_space<any>>) target(%62 : memref<1x128xf32, #tpu.memory_space<vmem>>) target_semaphore(%64 : memref<!tpu.dma_semaphore, #tpu.memory_space<semaphore_mem>>)
    %c0_i32_32 = arith.constant 0 : i32
    %c0_i32_33 = arith.constant 0 : i32
    %c0_i32_34 = arith.constant 0 : i32
    %65 = tpu.memref_slice %arg4[%c0_i32_33, %c0_i32_34] : memref<64x128xf32, #tpu.memory_space<any>> -> memref<1x128xf32, #tpu.memory_space<any>>
    %c0_i32_35 = arith.constant 0 : i32
    %c0_i32_36 = arith.constant 0 : i32
    %66 = tpu.memref_slice %arg8[%c0_i32_35, %c0_i32_36] : memref<8x128xf32, #tpu.memory_space<vmem>> -> memref<1x128xf32, #tpu.memory_space<vmem>>
    %67 = tpu.memref_slice %arg9[%c0_i32_32] : memref<8x!tpu.dma_semaphore, #tpu.memory_space<semaphore_mem>> -> memref<1x!tpu.dma_semaphore, #tpu.memory_space<semaphore_mem>>
    %68 = tpu.memref_squeeze %67 : memref<1x!tpu.dma_semaphore, #tpu.memory_space<semaphore_mem>> -> memref<!tpu.dma_semaphore, #tpu.memory_space<semaphore_mem>>
    tpu.wait_dma2 semaphore(%68 : memref<!tpu.dma_semaphore, #tpu.memory_space<semaphore_mem>>) src(%65 : memref<1x128xf32, #tpu.memory_space<any>>) dst(%66 : memref<1x128xf32, #tpu.memory_space<vmem>>)
    %c1_i32_37 = arith.constant 1 : i32
    %c0_i32_38 = arith.constant 0 : i32
    %c0_i32_39 = arith.constant 0 : i32
    %69 = tpu.memref_slice %arg4[%c0_i32_38, %c0_i32_39] : memref<64x128xf32, #tpu.memory_space<any>> -> memref<1x128xf32, #tpu.memory_space<any>>
    %c1_i32_40 = arith.constant 1 : i32
    %c0_i32_41 = arith.constant 0 : i32
    %70 = tpu.memref_slice %arg8[%c1_i32_40, %c0_i32_41] : memref<8x128xf32, #tpu.memory_space<vmem>> -> memref<1x128xf32, #tpu.memory_space<vmem>>
    %71 = tpu.memref_slice %arg9[%c1_i32_37] : memref<8x!tpu.dma_semaphore, #tpu.memory_space<semaphore_mem>> -> memref<1x!tpu.dma_semaphore, #tpu.memory_space<semaphore_mem>>
    %72 = tpu.memref_squeeze %71 : memref<1x!tpu.dma_semaphore, #tpu.memory_space<semaphore_mem>> -> memref<!tpu.dma_semaphore, #tpu.memory_space<semaphore_mem>>
    tpu.wait_dma2 semaphore(%72 : memref<!tpu.dma_semaphore, #tpu.memory_space<semaphore_mem>>) src(%69 : memref<1x128xf32, #tpu.memory_space<any>>) dst(%70 : memref<1x128xf32, #tpu.memory_space<vmem>>)
    %c2_i32_42 = arith.constant 2 : i32
    %c0_i32_43 = arith.constant 0 : i32
    %c0_i32_44 = arith.constant 0 : i32
    %73 = tpu.memref_slice %arg4[%c0_i32_43, %c0_i32_44] : memref<64x128xf32, #tpu.memory_space<any>> -> memref<1x128xf32, #tpu.memory_space<any>>
    %c2_i32_45 = arith.constant 2 : i32
    %c0_i32_46 = arith.constant 0 : i32
    %74 = tpu.memref_slice %arg8[%c2_i32_45, %c0_i32_46] : memref<8x128xf32, #tpu.memory_space<vmem>> -> memref<1x128xf32, #tpu.memory_space<vmem>>
    %75 = tpu.memref_slice %arg9[%c2_i32_42] : memref<8x!tpu.dma_semaphore, #tpu.memory_space<semaphore_mem>> -> memref<1x!tpu.dma_semaphore, #tpu.memory_space<semaphore_mem>>
    %76 = tpu.memref_squeeze %75 : memref<1x!tpu.dma_semaphore, #tpu.memory_space<semaphore_mem>> -> memref<!tpu.dma_semaphore, #tpu.memory_space<semaphore_mem>>
    tpu.wait_dma2 semaphore(%76 : memref<!tpu.dma_semaphore, #tpu.memory_space<semaphore_mem>>) src(%73 : memref<1x128xf32, #tpu.memory_space<any>>) dst(%74 : memref<1x128xf32, #tpu.memory_space<vmem>>)
    %c3_i32_47 = arith.constant 3 : i32
    %c0_i32_48 = arith.constant 0 : i32
    %c0_i32_49 = arith.constant 0 : i32
    %77 = tpu.memref_slice %arg4[%c0_i32_48, %c0_i32_49] : memref<64x128xf32, #tpu.memory_space<any>> -> memref<1x128xf32, #tpu.memory_space<any>>
    %c3_i32_50 = arith.constant 3 : i32
    %c0_i32_51 = arith.constant 0 : i32
    %78 = tpu.memref_slice %arg8[%c3_i32_50, %c0_i32_51] : memref<8x128xf32, #tpu.memory_space<vmem>> -> memref<1x128xf32, #tpu.memory_space<vmem>>
    %79 = tpu.memref_slice %arg9[%c3_i32_47] : memref<8x!tpu.dma_semaphore, #tpu.memory_space<semaphore_mem>> -> memref<1x!tpu.dma_semaphore, #tpu.memory_space<semaphore_mem>>
    %80 = tpu.memref_squeeze %79 : memref<1x!tpu.dma_semaphore, #tpu.memory_space<semaphore_mem>> -> memref<!tpu.dma_semaphore, #tpu.memory_space<semaphore_mem>>
    tpu.wait_dma2 semaphore(%80 : memref<!tpu.dma_semaphore, #tpu.memory_space<semaphore_mem>>) src(%77 : memref<1x128xf32, #tpu.memory_space<any>>) dst(%78 : memref<1x128xf32, #tpu.memory_space<vmem>>)
    %c4_i32_52 = arith.constant 4 : i32
    %c0_i32_53 = arith.constant 0 : i32
    %c0_i32_54 = arith.constant 0 : i32
    %81 = tpu.memref_slice %arg4[%c0_i32_53, %c0_i32_54] : memref<64x128xf32, #tpu.memory_space<any>> -> memref<1x128xf32, #tpu.memory_space<any>>
    %c4_i32_55 = arith.constant 4 : i32
    %c0_i32_56 = arith.constant 0 : i32
    %82 = tpu.memref_slice %arg8[%c4_i32_55, %c0_i32_56] : memref<8x128xf32, #tpu.memory_space<vmem>> -> memref<1x128xf32, #tpu.memory_space<vmem>>
    %83 = tpu.memref_slice %arg9[%c4_i32_52] : memref<8x!tpu.dma_semaphore, #tpu.memory_space<semaphore_mem>> -> memref<1x!tpu.dma_semaphore, #tpu.memory_space<semaphore_mem>>
    %84 = tpu.memref_squeeze %83 : memref<1x!tpu.dma_semaphore, #tpu.memory_space<semaphore_mem>> -> memref<!tpu.dma_semaphore, #tpu.memory_space<semaphore_mem>>
    tpu.wait_dma2 semaphore(%84 : memref<!tpu.dma_semaphore, #tpu.memory_space<semaphore_mem>>) src(%81 : memref<1x128xf32, #tpu.memory_space<any>>) dst(%82 : memref<1x128xf32, #tpu.memory_space<vmem>>)
    %c5_i32_57 = arith.constant 5 : i32
    %c0_i32_58 = arith.constant 0 : i32
    %c0_i32_59 = arith.constant 0 : i32
    %85 = tpu.memref_slice %arg4[%c0_i32_58, %c0_i32_59] : memref<64x128xf32, #tpu.memory_space<any>> -> memref<1x128xf32, #tpu.memory_space<any>>
    %c5_i32_60 = arith.constant 5 : i32
    %c0_i32_61 = arith.constant 0 : i32
    %86 = tpu.memref_slice %arg8[%c5_i32_60, %c0_i32_61] : memref<8x128xf32, #tpu.memory_space<vmem>> -> memref<1x128xf32, #tpu.memory_space<vmem>>
    %87 = tpu.memref_slice %arg9[%c5_i32_57] : memref<8x!tpu.dma_semaphore, #tpu.memory_space<semaphore_mem>> -> memref<1x!tpu.dma_semaphore, #tpu.memory_space<semaphore_mem>>
    %88 = tpu.memref_squeeze %87 : memref<1x!tpu.dma_semaphore, #tpu.memory_space<semaphore_mem>> -> memref<!tpu.dma_semaphore, #tpu.memory_space<semaphore_mem>>
    tpu.wait_dma2 semaphore(%88 : memref<!tpu.dma_semaphore, #tpu.memory_space<semaphore_mem>>) src(%85 : memref<1x128xf32, #tpu.memory_space<any>>) dst(%86 : memref<1x128xf32, #tpu.memory_space<vmem>>)
    %c6_i32_62 = arith.constant 6 : i32
    %c0_i32_63 = arith.constant 0 : i32
    %c0_i32_64 = arith.constant 0 : i32
    %89 = tpu.memref_slice %arg4[%c0_i32_63, %c0_i32_64] : memref<64x128xf32, #tpu.memory_space<any>> -> memref<1x128xf32, #tpu.memory_space<any>>
    %c6_i32_65 = arith.constant 6 : i32
    %c0_i32_66 = arith.constant 0 : i32
    %90 = tpu.memref_slice %arg8[%c6_i32_65, %c0_i32_66] : memref<8x128xf32, #tpu.memory_space<vmem>> -> memref<1x128xf32, #tpu.memory_space<vmem>>
    %91 = tpu.memref_slice %arg9[%c6_i32_62] : memref<8x!tpu.dma_semaphore, #tpu.memory_space<semaphore_mem>> -> memref<1x!tpu.dma_semaphore, #tpu.memory_space<semaphore_mem>>
    %92 = tpu.memref_squeeze %91 : memref<1x!tpu.dma_semaphore, #tpu.memory_space<semaphore_mem>> -> memref<!tpu.dma_semaphore, #tpu.memory_space<semaphore_mem>>
    tpu.wait_dma2 semaphore(%92 : memref<!tpu.dma_semaphore, #tpu.memory_space<semaphore_mem>>) src(%89 : memref<1x128xf32, #tpu.memory_space<any>>) dst(%90 : memref<1x128xf32, #tpu.memory_space<vmem>>)
    %c7_i32_67 = arith.constant 7 : i32
    %c0_i32_68 = arith.constant 0 : i32
    %c0_i32_69 = arith.constant 0 : i32
    %93 = tpu.memref_slice %arg4[%c0_i32_68, %c0_i32_69] : memref<64x128xf32, #tpu.memory_space<any>> -> memref<1x128xf32, #tpu.memory_space<any>>
    %c7_i32_70 = arith.constant 7 : i32
    %c0_i32_71 = arith.constant 0 : i32
    %94 = tpu.memref_slice %arg8[%c7_i32_70, %c0_i32_71] : memref<8x128xf32, #tpu.memory_space<vmem>> -> memref<1x128xf32, #tpu.memory_space<vmem>>
    %95 = tpu.memref_slice %arg9[%c7_i32_67] : memref<8x!tpu.dma_semaphore, #tpu.memory_space<semaphore_mem>> -> memref<1x!tpu.dma_semaphore, #tpu.memory_space<semaphore_mem>>
    %96 = tpu.memref_squeeze %95 : memref<1x!tpu.dma_semaphore, #tpu.memory_space<semaphore_mem>> -> memref<!tpu.dma_semaphore, #tpu.memory_space<semaphore_mem>>
    tpu.wait_dma2 semaphore(%96 : memref<!tpu.dma_semaphore, #tpu.memory_space<semaphore_mem>>) src(%93 : memref<1x128xf32, #tpu.memory_space<any>>) dst(%94 : memref<1x128xf32, #tpu.memory_space<vmem>>)
    %c0 = arith.constant 0 : index
    %c0_72 = arith.constant 0 : index
    %97 = vector.load %arg8[%c0, %c0_72] : memref<8x128xf32, #tpu.memory_space<vmem>>, vector<8x128xf32>
    %c0_73 = arith.constant 0 : index
    %c0_74 = arith.constant 0 : index
    %98 = vector.load %arg5[%c0_73, %c0_74] : memref<8x128xf32, #tpu.memory_space<vmem>>, vector<8x128xf32>
    %99 = arith.addf %97, %98 : vector<8x128xf32>
    %c0_i32_75 = arith.constant 0 : i32
    %100 = arith.addi %0, %c0_i32_75 : i32
    %101 = arith.index_cast %arg0 : i32 to index
    %102 = arith.index_cast %100 : i32 to index
    %103 = memref.load %arg3[%101, %102] : memref<2x16xi32, #tpu.memory_space<smem>>
    %104 = vector.extract_strided_slice %99 {offsets = [0, 0], sizes = [1, 128], strides = [1, 1]} : vector<8x128xf32> to vector<1x128xf32>
    %105 = vector.shape_cast %104 : vector<1x128xf32> to vector<128xf32>
    %106 = arith.index_cast %103 : i32 to index
    %c0_76 = arith.constant 0 : index
    %107 = vector.load %arg6[%106, %c0_76] : memref<2x128xf32, #tpu.memory_space<vmem>>, vector<1x128xf32>
    %108 = vector.shape_cast %107 : vector<1x128xf32> to vector<128xf32>
    %109 = arith.addf %105, %108 : vector<128xf32>
    %c0_77 = arith.constant 0 : index
    %c0_78 = arith.constant 0 : index
    %c0_79 = arith.constant 0 : index
    %110 = vector.load %arg7[%c0_77, %c0_78, %c0_79] : memref<1x8x128xf32, #tpu.memory_space<vmem>>, vector<1x1x128xf32>
    %111 = vector.shape_cast %110 : vector<1x1x128xf32> to vector<128xf32>
    %112 = vector.shape_cast %109 : vector<128xf32> to vector<1x1x128xf32>
    tpu.vector_store %arg7[%c0_77, %c0_78, %c0_79], %112 {strides = array<i32>} : memref<1x8x128xf32, #tpu.memory_space<vmem>>, vector<1x1x128xf32>,
    %c1_i32_80 = arith.constant 1 : i32
    %113 = arith.addi %0, %c1_i32_80 : i32
    %114 = arith.index_cast %arg0 : i32 to index
    %115 = arith.index_cast %113 : i32 to index
    %116 = memref.load %arg3[%114, %115] : memref<2x16xi32, #tpu.memory_space<smem>>
    %117 = vector.extract_strided_slice %99 {offsets = [1, 0], sizes = [1, 128], strides = [1, 1]} : vector<8x128xf32> to vector<1x128xf32>
    %118 = vector.shape_cast %117 : vector<1x128xf32> to vector<128xf32>
    %119 = arith.index_cast %116 : i32 to index
    %c0_81 = arith.constant 0 : index
    %120 = vector.load %arg6[%119, %c0_81] : memref<2x128xf32, #tpu.memory_space<vmem>>, vector<1x128xf32>
    %121 = vector.shape_cast %120 : vector<1x128xf32> to vector<128xf32>
    %122 = arith.addf %118, %121 : vector<128xf32>
    %c0_82 = arith.constant 0 : index
    %c1 = arith.constant 1 : index
    %c0_83 = arith.constant 0 : index
    %123 = vector.load %arg7[%c0_82, %c1, %c0_83] : memref<1x8x128xf32, #tpu.memory_space<vmem>>, vector<1x1x128xf32>
    %124 = vector.shape_cast %123 : vector<1x1x128xf32> to vector<128xf32>
    %125 = vector.shape_cast %122 : vector<128xf32> to vector<1x1x128xf32>
    tpu.vector_store %arg7[%c0_82, %c1, %c0_83], %125 {strides = array<i32>} : memref<1x8x128xf32, #tpu.memory_space<vmem>>, vector<1x1x128xf32>,
    %c2_i32_84 = arith.constant 2 : i32
    %126 = arith.addi %0, %c2_i32_84 : i32
    %127 = arith.index_cast %arg0 : i32 to index
    %128 = arith.index_cast %126 : i32 to index
    %129 = memref.load %arg3[%127, %128] : memref<2x16xi32, #tpu.memory_space<smem>>
    %130 = vector.extract_strided_slice %99 {offsets = [2, 0], sizes = [1, 128], strides = [1, 1]} : vector<8x128xf32> to vector<1x128xf32>
    %131 = vector.shape_cast %130 : vector<1x128xf32> to vector<128xf32>
    %132 = arith.index_cast %129 : i32 to index
    %c0_85 = arith.constant 0 : index
    %133 = vector.load %arg6[%132, %c0_85] : memref<2x128xf32, #tpu.memory_space<vmem>>, vector<1x128xf32>
    %134 = vector.shape_cast %133 : vector<1x128xf32> to vector<128xf32>
    %135 = arith.addf %131, %134 : vector<128xf32>
    %c0_86 = arith.constant 0 : index
    %c2 = arith.constant 2 : index
    %c0_87 = arith.constant 0 : index
    %136 = vector.load %arg7[%c0_86, %c2, %c0_87] : memref<1x8x128xf32, #tpu.memory_space<vmem>>, vector<1x1x128xf32>
    %137 = vector.shape_cast %136 : vector<1x1x128xf32> to vector<128xf32>
    %138 = vector.shape_cast %135 : vector<128xf32> to vector<1x1x128xf32>
    tpu.vector_store %arg7[%c0_86, %c2, %c0_87], %138 {strides = array<i32>} : memref<1x8x128xf32, #tpu.memory_space<vmem>>, vector<1x1x128xf32>,
    %c3_i32_88 = arith.constant 3 : i32
    %139 = arith.addi %0, %c3_i32_88 : i32
    %140 = arith.index_cast %arg0 : i32 to index
    %141 = arith.index_cast %139 : i32 to index
    %142 = memref.load %arg3[%140, %141] : memref<2x16xi32, #tpu.memory_space<smem>>
    %143 = vector.extract_strided_slice %99 {offsets = [3, 0], sizes = [1, 128], strides = [1, 1]} : vector<8x128xf32> to vector<1x128xf32>
    %144 = vector.shape_cast %143 : vector<1x128xf32> to vector<128xf32>
    %145 = arith.index_cast %142 : i32 to index
    %c0_89 = arith.constant 0 : index
    %146 = vector.load %arg6[%145, %c0_89] : memref<2x128xf32, #tpu.memory_space<vmem>>, vector<1x128xf32>
    %147 = vector.shape_cast %146 : vector<1x128xf32> to vector<128xf32>
    %148 = arith.addf %144, %147 : vector<128xf32>
    %c0_90 = arith.constant 0 : index
    %c3 = arith.constant 3 : index
    %c0_91 = arith.constant 0 : index
    %149 = vector.load %arg7[%c0_90, %c3, %c0_91] : memref<1x8x128xf32, #tpu.memory_space<vmem>>, vector<1x1x128xf32>
    %150 = vector.shape_cast %149 : vector<1x1x128xf32> to vector<128xf32>
    %151 = vector.shape_cast %148 : vector<128xf32> to vector<1x1x128xf32>
    tpu.vector_store %arg7[%c0_90, %c3, %c0_91], %151 {strides = array<i32>} : memref<1x8x128xf32, #tpu.memory_space<vmem>>, vector<1x1x128xf32>,
    %c4_i32_92 = arith.constant 4 : i32
    %152 = arith.addi %0, %c4_i32_92 : i32
    %153 = arith.index_cast %arg0 : i32 to index
    %154 = arith.index_cast %152 : i32 to index
    %155 = memref.load %arg3[%153, %154] : memref<2x16xi32, #tpu.memory_space<smem>>
    %156 = vector.extract_strided_slice %99 {offsets = [4, 0], sizes = [1, 128], strides = [1, 1]} : vector<8x128xf32> to vector<1x128xf32>
    %157 = vector.shape_cast %156 : vector<1x128xf32> to vector<128xf32>
    %158 = arith.index_cast %155 : i32 to index
    %c0_93 = arith.constant 0 : index
    %159 = vector.load %arg6[%158, %c0_93] : memref<2x128xf32, #tpu.memory_space<vmem>>, vector<1x128xf32>
    %160 = vector.shape_cast %159 : vector<1x128xf32> to vector<128xf32>
    %161 = arith.addf %157, %160 : vector<128xf32>
    %c0_94 = arith.constant 0 : index
    %c4 = arith.constant 4 : index
    %c0_95 = arith.constant 0 : index
    %162 = vector.load %arg7[%c0_94, %c4, %c0_95] : memref<1x8x128xf32, #tpu.memory_space<vmem>>, vector<1x1x128xf32>
    %163 = vector.shape_cast %162 : vector<1x1x128xf32> to vector<128xf32>
    %164 = vector.shape_cast %161 : vector<128xf32> to vector<1x1x128xf32>
    tpu.vector_store %arg7[%c0_94, %c4, %c0_95], %164 {strides = array<i32>} : memref<1x8x128xf32, #tpu.memory_space<vmem>>, vector<1x1x128xf32>,
    %c5_i32_96 = arith.constant 5 : i32
    %165 = arith.addi %0, %c5_i32_96 : i32
    %166 = arith.index_cast %arg0 : i32 to index
    %167 = arith.index_cast %165 : i32 to index
    %168 = memref.load %arg3[%166, %167] : memref<2x16xi32, #tpu.memory_space<smem>>
    %169 = vector.extract_strided_slice %99 {offsets = [5, 0], sizes = [1, 128], strides = [1, 1]} : vector<8x128xf32> to vector<1x128xf32>
    %170 = vector.shape_cast %169 : vector<1x128xf32> to vector<128xf32>
    %171 = arith.index_cast %168 : i32 to index
    %c0_97 = arith.constant 0 : index
    %172 = vector.load %arg6[%171, %c0_97] : memref<2x128xf32, #tpu.memory_space<vmem>>, vector<1x128xf32>
    %173 = vector.shape_cast %172 : vector<1x128xf32> to vector<128xf32>
    %174 = arith.addf %170, %173 : vector<128xf32>
    %c0_98 = arith.constant 0 : index
    %c5 = arith.constant 5 : index
    %c0_99 = arith.constant 0 : index
    %175 = vector.load %arg7[%c0_98, %c5, %c0_99] : memref<1x8x128xf32, #tpu.memory_space<vmem>>, vector<1x1x128xf32>
    %176 = vector.shape_cast %175 : vector<1x1x128xf32> to vector<128xf32>
    %177 = vector.shape_cast %174 : vector<128xf32> to vector<1x1x128xf32>
    tpu.vector_store %arg7[%c0_98, %c5, %c0_99], %177 {strides = array<i32>} : memref<1x8x128xf32, #tpu.memory_space<vmem>>, vector<1x1x128xf32>,
    %c6_i32_100 = arith.constant 6 : i32
    %178 = arith.addi %0, %c6_i32_100 : i32
    %179 = arith.index_cast %arg0 : i32 to index
    %180 = arith.index_cast %178 : i32 to index
    %181 = memref.load %arg3[%179, %180] : memref<2x16xi32, #tpu.memory_space<smem>>
    %182 = vector.extract_strided_slice %99 {offsets = [6, 0], sizes = [1, 128], strides = [1, 1]} : vector<8x128xf32> to vector<1x128xf32>
    %183 = vector.shape_cast %182 : vector<1x128xf32> to vector<128xf32>
    %184 = arith.index_cast %181 : i32 to index
    %c0_101 = arith.constant 0 : index
    %185 = vector.load %arg6[%184, %c0_101] : memref<2x128xf32, #tpu.memory_space<vmem>>, vector<1x128xf32>
    %186 = vector.shape_cast %185 : vector<1x128xf32> to vector<128xf32>
    %187 = arith.addf %183, %186 : vector<128xf32>
    %c0_102 = arith.constant 0 : index
    %c6 = arith.constant 6 : index
    %c0_103 = arith.constant 0 : index
    %188 = vector.load %arg7[%c0_102, %c6, %c0_103] : memref<1x8x128xf32, #tpu.memory_space<vmem>>, vector<1x1x128xf32>
    %189 = vector.shape_cast %188 : vector<1x1x128xf32> to vector<128xf32>
    %190 = vector.shape_cast %187 : vector<128xf32> to vector<1x1x128xf32>
    tpu.vector_store %arg7[%c0_102, %c6, %c0_103], %190 {strides = array<i32>} : memref<1x8x128xf32, #tpu.memory_space<vmem>>, vector<1x1x128xf32>,
    %c7_i32_104 = arith.constant 7 : i32
    %191 = arith.addi %0, %c7_i32_104 : i32
    %192 = arith.index_cast %arg0 : i32 to index
    %193 = arith.index_cast %191 : i32 to index
    %194 = memref.load %arg3[%192, %193] : memref<2x16xi32, #tpu.memory_space<smem>>
    %195 = vector.extract_strided_slice %99 {offsets = [7, 0], sizes = [1, 128], strides = [1, 1]} : vector<8x128xf32> to vector<1x128xf32>
    %196 = vector.shape_cast %195 : vector<1x128xf32> to vector<128xf32>
    %197 = arith.index_cast %194 : i32 to index
    %c0_105 = arith.constant 0 : index
    %198 = vector.load %arg6[%197, %c0_105] : memref<2x128xf32, #tpu.memory_space<vmem>>, vector<1x128xf32>
    %199 = vector.shape_cast %198 : vector<1x128xf32> to vector<128xf32>
    %200 = arith.addf %196, %199 : vector<128xf32>
    %c0_106 = arith.constant 0 : index
    %c7 = arith.constant 7 : index
    %c0_107 = arith.constant 0 : index
    %201 = vector.load %arg7[%c0_106, %c7, %c0_107] : memref<1x8x128xf32, #tpu.memory_space<vmem>>, vector<1x1x128xf32>
    %202 = vector.shape_cast %201 : vector<1x1x128xf32> to vector<128xf32>
    %203 = vector.shape_cast %200 : vector<128xf32> to vector<1x1x128xf32>
    tpu.vector_store %arg7[%c0_106, %c7, %c0_107], %203 {strides = array<i32>} : memref<1x8x128xf32, #tpu.memory_space<vmem>>, vector<1x1x128xf32>,
    return
  }
  func.func @transform_1(%arg0: i32, %arg1: i32, %arg2: memref<2x16xi32, #tpu.memory_space<smem>>, %arg3: memref<2x16xi32, #tpu.memory_space<smem>>) -> (i32, i32) {
    %c0_i32 = arith.constant 0 : i32
    %c0_i32_0 = arith.constant 0 : i32
    return %arg1, %c0_i32 : i32, i32
  }
  func.func @transform_2(%arg0: i32, %arg1: i32, %arg2: memref<2x16xi32, #tpu.memory_space<smem>>, %arg3: memref<2x16xi32, #tpu.memory_space<smem>>) -> (i32, i32) {
    %c0_i32 = arith.constant 0 : i32
    %c0_i32_0 = arith.constant 0 : i32
    %c0_i32_1 = arith.constant 0 : i32
    return %c0_i32, %c0_i32_0 : i32, i32
  }
  func.func @transform_3(%arg0: i32, %arg1: i32, %arg2: memref<2x16xi32, #tpu.memory_space<smem>>, %arg3: memref<2x16xi32, #tpu.memory_space<smem>>) -> (i32, i32, i32) {
    %c0_i32 = arith.constant 0 : i32
    %c0_i32_0 = arith.constant 0 : i32
    return %arg0, %arg1, %c0_i32 : i32, i32, i32
  }
}

</mosaic_0001>

<llo_original>
// kernel: tpu_custom_call.1
$region0: #{tpu_custom_call.1}
  #allocation0 [shape = 'u32[]', space=smem, size = 0x4, offset = 0x4, fixed_abs, tag = 'smem constant byte address 0x4 - core index']
  #allocation1 [shape = 'u32[72,128]{1,0:T(1,128)}', space=vmem, size = 0x9000, scoped, tag = 'internal scratch']
  #allocation2 [shape = 'f32[8,128]{1,0:T(8,128)}', space=vmem, size = 0x1000, scoped, tag = 'scratch operand']
  #allocation3 [shape = 's32[8]{0}', space=sflag, size = 0x20, scoped, tag = 'scratch operand']
  #allocation4 [shape = 's32[1]{0}', space=sflag, size = 0x4, scoped, tag = 'scoped memory for tpu_custom_call.1']
  #allocation5 [shape = 'u8[1024]{0}', space=smem, size = 0x400, scoped, tag = 'prefetched SMEM operand 0']
  #allocation6 [shape = 'u8[1024]{0}', space=smem, size = 0x400, scoped, tag = 'prefetched SMEM operand 1']
  #allocation11 [shape = 's32[]', space=sflag, size = 0x4, offset = 0, fixed_abs, tag = 'sflag constant byte address 0x0 - dummy sync flag']
  #allocation12 [shape = 's32[]', space=sflag, size = 0x4, offset = 0, fixed_abs, tag = 'sflag constant byte address 0x0 - dummy sync flag']
  #allocation13 [shape = 'u32[]', space=smem, size = 0x4, offset = 0x44, fixed_abs, tag = 'smem constant byte address 0x44 - assertion arg 0']
  #allocation14 [shape = 'u32[]', space=smem, size = 0x4, offset = 0x48, fixed_abs, tag = 'smem constant byte address 0x48 - assertion arg 1']
  #allocation15 [shape = 's32[]', space=sflag, size = 0x4, offset = 0, fixed_abs, tag = 'sflag constant byte address 0x0 - dummy sync flag']
  #allocation16 [shape = 's32[]', space=sflag, size = 0x4, offset = 0, fixed_abs, tag = 'sflag constant byte address 0x0 - dummy sync flag']
  #allocation17 [shape = 's32[]', space=sflag, size = 0x4, offset = 0, fixed_abs, tag = 'sflag constant byte address 0x0 - dummy sync flag']
  #allocation18 [shape = 's32[]', space=sflag, size = 0x4, offset = 0, fixed_abs, tag = 'sflag constant byte address 0x0 - dummy sync flag']
  #allocation19 [shape = 's32[]', space=sflag, size = 0x4, offset = 0, fixed_abs, tag = 'sflag constant byte address 0x0 - dummy sync flag']
  #allocation20 [shape = 's32[]', space=sflag, size = 0x4, offset = 0, fixed_abs, tag = 'sflag constant byte address 0x0 - dummy sync flag']
  #allocation21 [shape = 's32[]', space=sflag, size = 0x4, offset = 0, fixed_abs, tag = 'sflag constant byte address 0x0 - dummy sync flag']
  #allocation22 [shape = 's32[]', space=sflag, size = 0x4, offset = 0, fixed_abs, tag = 'sflag constant byte address 0x0 - dummy sync flag']
  #allocation23 [shape = 's32[]', space=sflag, size = 0x4, offset = 0, fixed_abs, tag = 'sflag constant byte address 0x0 - dummy sync flag']
  #allocation24 [shape = 's32[]', space=sflag, size = 0x4, offset = 0, fixed_abs, tag = 'sflag constant byte address 0x0 - dummy sync flag']
  #allocation25 [shape = 's32[]', space=sflag, size = 0x4, offset = 0, fixed_abs, tag = 'sflag constant byte address 0x0 - dummy sync flag']
  #allocation26 [shape = 's32[]', space=sflag, size = 0x4, offset = 0, fixed_abs, tag = 'sflag constant byte address 0x0 - dummy sync flag']
  #allocation27 [shape = 's32[]', space=sflag, size = 0x4, offset = 0, fixed_abs, tag = 'sflag constant byte address 0x0 - dummy sync flag']
  #allocation28 [shape = 's32[]', space=sflag, size = 0x4, offset = 0, fixed_abs, tag = 'sflag constant byte address 0x0 - dummy sync flag']
  %s0 = inlined_call_operand.hbm [shape: s32[2,16], index: 0, kind: input, shape index: {}]
  %s1 = inlined_call_operand.hbm [shape: s32[2,16], index: 1, kind: input, shape index: {}]
  %s2 = inlined_call_operand.hbm [shape: f32[64,128], index: 2, kind: input, shape index: {}]
  %s3 = inlined_call_operand.hbm [shape: f32[16,128], index: 3, kind: input, shape index: {}]
  %s4 = inlined_call_operand.vmem [shape: f32[2,128], index: 4, kind: input, shape index: {}]
  %s5 = inlined_call_operand.hbm [shape: f32[2,16,128], index: 5, kind: output, shape index: {}]
  %s6 = sld [smem:[#allocation0]]
  $region77: #{tpu_custom_call.1} parent=0
    _
  %s8 = ssub.s32 1, %s6
  %s9 = scalar_select 0, %s8, %s6
  %s11 = sshll.u32 %s0, 4
  %s12 = int_to_ptr.hbm [resolvable:$true] %s11
  %14 = dma.hbm_to_smem %s12, 32, [#allocation5], [#allocation4]
  %s16 = sshll.u32 %s1, 4
  %s17 = int_to_ptr.hbm [resolvable:$true] %s16
  %19 = dma.hbm_to_smem %s17, 32, [#allocation6], [#allocation4]
  %21 = dma.done [#allocation4], 64
  %22 = sfence
  $region1: #{tpu_custom_call.1} parent=0
    #allocation7 [shape = 'u8[8192]{0}', space=vmem, size = 0x2000, scoped, tag = 'input window, operand 3']
    #allocation8 [shape = 's32[2]{0}', space=sflag, size = 0x8, scoped, tag = 'scoped memory for tpu_custom_call.1']
    #allocation9 [shape = 's32[2]{0}', space=sflag, size = 0x8, scoped, tag = 'scoped memory for tpu_custom_call.1']
    #allocation10 [shape = 'u8[8192]{0}', space=vmem, size = 0x2000, scoped, tag = 'output window, operand 0']
    %23 = vsyncpa [#allocation8], 0
    %s24 = scalar_lea.sflag [#allocation8], 1
    %25 = vsyncpa %s24, 0
    %26 = vsyncpa [#allocation9], 0
    %s27 = scalar_lea.sflag [#allocation9], 1
    %28 = vsyncpa %s27, 0
    loop: start=0, step=1, limit=6
    $region2: #{tpu_custom_call.1} parent=1 // loop_pre_header
      _
    $region3: #{tpu_custom_call.1} parent=1 // loop_header
      %s30 = sphi 0, %s34
      %p31 = scmp.ge.s32.totalorder %s30, 6
      %s37 = sphi 0, %s49
      %s38 = sphi 0, %s45
      %s39 = sphi 0, %s37
      %s40 = sphi 0, %s38
      %s41 = sphi 0, %s39
      %s42 = sphi 0, %s40
      %s52 = sphi 0, %s54
      %s55 = sphi 0, %s52
      %s56 = sphi 0, %s55
      %s72 = sphi 0, %s56
      %s76 = sphi 0, %s76
      %s78 = sphi 0, %s76
      %s79 = sphi 0, %s78
      %s93 = sphi 0, %s79
      %s101 = sphi 0, %s103
      %s104 = sphi 0, %s101
      %s105 = sphi 0, %s104
      %s121 = sphi 0, %s105
    $region4: #{tpu_custom_call.1} parent=1 // loop_header_branch
      %33 = sbr.rel (%p31) target = $region8
    $region5: #{tpu_custom_call.1} parent=1 // loop_body
      %s35 = ssub.s32 %s30, 1
      %s36 = ssub.s32 %s30, 2
      %s43 = sadd.s32 1, %s38
      %p44 = scmp.ge.s32.totalorder %s43, 2
      %s45 = scalar_select %p44, 0, %s43
      %s46 = sadd.s32 1, %s37
      %s47 = scalar_select %p44, %s46, %s37
      %p48 = scmp.ge.s32.totalorder %s47, 2
      %s49 = scalar_select %p48, 0, %s47
      %s50 = ssub.s32 %s38, %s45
      %p51 = scmp.eq.s32.totalorder %s50, 0
      %s53 = sadd.s32 %s52, 1
      %s54 = scalar_select %p51, %s52, %s53
      %p57 = pneg %p51
      %p58 = scmp.eq.s32.totalorder %s30, 3
      %p59 = por %p57, %p58
      %p60 = scmp.ne.s32.totalorder %s52, %s55
      %p61 = scmp.eq.s32.totalorder %s30, 0
      %p62 = por %p60, %p61
      %p63 = scmp.ne.s32.totalorder %s52, %s55
      %p64 = scmp.eq.s32.totalorder %s35, 3
      %p65 = por %p63, %p64
      %p66 = scmp.ne.s32.totalorder %s55, %s56
      %p67 = scmp.eq.s32.totalorder %s35, 0
      %p68 = por %p66, %p67
      %p69 = scmp.ne.s32.totalorder %s55, %s56
      %p70 = scmp.eq.s32.totalorder %s36, 3
      %p71 = por %p69, %p70
      %p73 = scmp.ne.s32.totalorder %s56, %s72
      %p74 = scmp.eq.s32.totalorder %s36, 0
      %p75 = por %p73, %p74
      %s77 = sadd.s32 %s76, 1
      %p80 = scmp.eq.s32.totalorder %s30, 3
      %p81 = scmp.ne.s32.totalorder %s76, %s78
      %p82 = scmp.eq.s32.totalorder %s30, 0
      %p83 = por %p81, %p82
      %p84 = scmp.ne.s32.totalorder %s76, %s78
      %p85 = scmp.eq.s32.totalorder %s35, 3
      %p86 = por %p84, %p85
      %p87 = scmp.ne.s32.totalorder %s78, %s79
      %p88 = scmp.eq.s32.totalorder %s35, 0
      %p89 = por %p87, %p88
      %p90 = scmp.ne.s32.totalorder %s78, %s79
      %p91 = scmp.eq.s32.totalorder %s36, 3
      %p92 = por %p90, %p91
      %p94 = scmp.ne.s32.totalorder %s79, %s93
      %p95 = scmp.eq.s32.totalorder %s36, 0
      %p96 = por %p94, %p95
      %s97 = ssub.s32 %s37, %s49
      %s98 = ssub.s32 %s38, %s45
      %s99 = sor.u32 %s97, %s98
      %p100 = scmp.eq.s32.totalorder %s99, 0
      %s102 = sadd.s32 %s101, 1
      %s103 = scalar_select %p100, %s101, %s102
      %p106 = pneg %p100
      %p107 = scmp.eq.s32.totalorder %s30, 3
      %p108 = por %p106, %p107
      %p109 = scmp.ne.s32.totalorder %s101, %s104
      %p110 = scmp.eq.s32.totalorder %s30, 0
      %p111 = por %p109, %p110
      %p112 = scmp.ne.s32.totalorder %s101, %s104
      %p113 = scmp.eq.s32.totalorder %s35, 3
      %p114 = por %p112, %p113
      %p115 = scmp.ne.s32.totalorder %s104, %s105
      %p116 = scmp.eq.s32.totalorder %s35, 0
      %p117 = por %p115, %p116
      %p118 = scmp.ne.s32.totalorder %s104, %s105
      %p119 = scmp.eq.s32.totalorder %s36, 3
      %p120 = por %p118, %p119
      %p122 = scmp.ne.s32.totalorder %s105, %s121
      %p123 = scmp.eq.s32.totalorder %s36, 0
      %p124 = por %p122, %p123
      %p125 = scmp.le.s32.totalorder 1, %s30
      %p126 = scmp.lt.s32.totalorder %s30, 5
      %p127 = pnand %p125, %p126
      %p128 = pneg %p127
      // Predicated region
      $region9: #{tpu_custom_call.1} parent=5 // pred_check
        _
      $region10: #{tpu_custom_call.1} parent=5 // pred_check_branch
        %130 = sbr.rel (%p127) target = $region12
      $region11: #{tpu_custom_call.1} parent=5 // pred_region
        %s131 = ssub.s32 %s30, 1
        // Predicated region
        $region13: #{tpu_custom_call.1} parent=11 // pred_check
          %p132 = pneg %p89
        $region14: #{tpu_custom_call.1} parent=11 // pred_check_branch
          %134 = sbr.rel (%p132) target = $region16
        $region15: #{tpu_custom_call.1} parent=11 // pred_region
          _
        $region16: #{tpu_custom_call.1} parent=11 // pred_fallthru
          _
      $region12: #{tpu_custom_call.1} parent=5 // pred_fallthru
        _
      %p135 = scmp.lt.s32.totalorder %s30, 4
      // Predicated region
      $region17: #{tpu_custom_call.1} parent=5 // pred_check
        %p136 = pneg %p135
      $region18: #{tpu_custom_call.1} parent=5 // pred_check_branch
        %138 = sbr.rel (%p136) target = $region20
      $region19: #{tpu_custom_call.1} parent=5 // pred_region
        // Predicated region
        $region21: #{tpu_custom_call.1} parent=19 // pred_check
          %p139 = pneg %p62
        $region22: #{tpu_custom_call.1} parent=19 // pred_check_branch
          %141 = sbr.rel (%p139) target = $region24
        $region23: #{tpu_custom_call.1} parent=19 // pred_region
          %s142 = sand.u32 %s52, 1
          %s143 = scalar_lea.sflag [#allocation8], %s142
          %s144 = sand.u32 %s52, 1
          %s145 = smul.addr %s144, 8
          %s146 = scalar_lea.vmem [#allocation7], %s145
          %148 = vsyncadd %s143, 0
          %s149 = smul.addr %s38, 8
          %s150 = scalar_lea.hbm %s3, %s149
          %s152 = sshll.u32 %s150, 4
          %s153 = int_to_ptr.hbm [resolvable:$true] %s152
          %s154 = sshll.u32 %s146, 4
          %s155 = int_to_ptr.vmem [resolvable:$true] %s154
          %157 = dma.hbm_to_vmem [thread:$0]  %s153, 128, %s155, %s143
        $region24: #{tpu_custom_call.1} parent=19 // pred_fallthru
          _
      $region20: #{tpu_custom_call.1} parent=5 // pred_fallthru
        _
      %p158 = scmp.le.s32.totalorder 1, %s30
      %p159 = scmp.lt.s32.totalorder %s30, 5
      %p160 = pnand %p158, %p159
      %p161 = pneg %p160
      // Predicated region
      $region25: #{tpu_custom_call.1} parent=5 // pred_check
        _
      $region26: #{tpu_custom_call.1} parent=5 // pred_check_branch
        %163 = sbr.rel (%p160) target = $region28
      $region27: #{tpu_custom_call.1} parent=5 // pred_region
        %s164 = ssub.s32 %s30, 1
        %s165 = sand.u32 %s55, 1
        %s166 = scalar_lea.sflag [#allocation8], %s165
        %s167 = sand.u32 %s55, 1
        %s168 = smul.addr %s167, 8
        %s169 = scalar_lea.vmem [#allocation7], %s168
        // Predicated region
        $region29: #{tpu_custom_call.1} parent=27 // pred_check
          %p170 = pneg %p68
        $region30: #{tpu_custom_call.1} parent=27 // pred_check_branch
          %172 = sbr.rel (%p170) target = $region32
        $region31: #{tpu_custom_call.1} parent=27 // pred_region
          %174 = dma.done %s166, 128
        $region32: #{tpu_custom_call.1} parent=27 // pred_fallthru
          _
        %s175 = sand.u32 %s55, 1
        %s176 = scalar_lea.sflag [#allocation8], %s175
        %s177 = sand.u32 %s55, 1
        %s178 = smul.addr %s177, 8
        %s179 = scalar_lea.vmem [#allocation7], %s178
        %p180 = pneg %p68
        %p181 = pneg %p65
        %p182 = pneg %p89
        %p183 = pneg %p86
        %p184 = pneg %p117
        %p185 = pneg %p114
        %s186 = sand.u32 %s104, 1
        %s187 = scalar_lea.sflag [#allocation9], %s186
        %s188 = sand.u32 %s104, 1
        %s189 = smul.addr %s188, 8
        %s190 = scalar_lea.vmem [#allocation10], %s189
        %s191 = smul.u32 %s40, 8
        %s192 = sshra.s32 %s191, 7
        %s193 = sand.u32 %s191, 127
        %s194 = sadd.s32 %s192, %s39
        %s195 = smul.u32 %s194, 128
        %s196 = sshra.s32 %s191, 7
        %s197 = sand.u32 %s191, 127
        %s198 = sadd.s32 %s195, %s197
        %s199 = sld [smem:[#allocation5 + %s198]]
        %s200 = scalar_lea.hbm %s2, %s199
        // Predicated region
        $region33: #{tpu_custom_call.1} parent=27 // pred_check
          _
        $region34: #{tpu_custom_call.1} parent=27 // pred_check_branch
          %202 = sbr.rel target = $region36
        $region35: #{tpu_custom_call.1} parent=27 // pred_region
          %203 = sst [smem:[#allocation13]] [#allocation12]
          %204 = sst [smem:[#allocation14]] [#allocation11]
        $region36: #{tpu_custom_call.1} parent=27 // pred_fallthru
          _
        %206 = shalt.err (0)
        %s208 = sshll.u32 %s200, 4
        %s209 = int_to_ptr.hbm [resolvable:$true] %s208
        %s210 = sshll.u32 [#allocation2], 4
        %s211 = int_to_ptr.vmem [resolvable:$true] %s210
        %213 = dma.hbm_to_vmem [thread:$0]  %s209, 16, %s211, [#allocation3]
        %s214 = sadd.s32 %s191, 1
        %s215 = sshra.s32 %s214, 7
        %s216 = sand.u32 %s214, 127
        %s217 = sadd.s32 %s215, %s39
        %s218 = smul.u32 %s217, 128
        %s219 = sshra.s32 %s214, 7
        %s220 = sand.u32 %s214, 127
        %s221 = sadd.s32 %s218, %s220
        %s222 = sld [smem:[#allocation5 + %s221]]
        %s223 = scalar_lea.hbm %s2, %s222
        %s224 = scalar_lea.vmem [#allocation2], 1
        %s225 = scalar_lea.sflag [#allocation3], 1
        // Predicated region
        $region37: #{tpu_custom_call.1} parent=27 // pred_check
          _
        $region38: #{tpu_custom_call.1} parent=27 // pred_check_branch
          %227 = sbr.rel target = $region40
        $region39: #{tpu_custom_call.1} parent=27 // pred_region
          %228 = sst [smem:[#allocation13]] [#allocation16]
          %229 = sst [smem:[#allocation14]] [#allocation15]
        $region40: #{tpu_custom_call.1} parent=27 // pred_fallthru
          _
        %231 = shalt.err (0)
        %s233 = sshll.u32 %s223, 4
        %s234 = int_to_ptr.hbm [resolvable:$true] %s233
        %s235 = sshll.u32 %s224, 4
        %s236 = int_to_ptr.vmem [resolvable:$true] %s235
        %238 = dma.hbm_to_vmem [thread:$0]  %s234, 16, %s236, %s225
        %s239 = sadd.s32 %s191, 2
        %s240 = sshra.s32 %s239, 7
        %s241 = sand.u32 %s239, 127
        %s242 = sadd.s32 %s240, %s39
        %s243 = smul.u32 %s242, 128
        %s244 = sshra.s32 %s239, 7
        %s245 = sand.u32 %s239, 127
        %s246 = sadd.s32 %s243, %s245
        %s247 = sld [smem:[#allocation5 + %s246]]
        %s248 = scalar_lea.hbm %s2, %s247
        %s249 = scalar_lea.vmem [#allocation2], 2
        %s250 = scalar_lea.sflag [#allocation3], 2
        // Predicated region
        $region41: #{tpu_custom_call.1} parent=27 // pred_check
          _
        $region42: #{tpu_custom_call.1} parent=27 // pred_check_branch
          %252 = sbr.rel target = $region44
        $region43: #{tpu_custom_call.1} parent=27 // pred_region
          %253 = sst [smem:[#allocation13]] [#allocation18]
          %254 = sst [smem:[#allocation14]] [#allocation17]
        $region44: #{tpu_custom_call.1} parent=27 // pred_fallthru
          _
        %256 = shalt.err (0)
        %s258 = sshll.u32 %s248, 4
        %s259 = int_to_ptr.hbm [resolvable:$true] %s258
        %s260 = sshll.u32 %s249, 4
        %s261 = int_to_ptr.vmem [resolvable:$true] %s260
        %263 = dma.hbm_to_vmem [thread:$0]  %s259, 16, %s261, %s250
        %s264 = sadd.s32 %s191, 3
        %s265 = sshra.s32 %s264, 7
        %s266 = sand.u32 %s264, 127
        %s267 = sadd.s32 %s265, %s39
        %s268 = smul.u32 %s267, 128
        %s269 = sshra.s32 %s264, 7
        %s270 = sand.u32 %s264, 127
        %s271 = sadd.s32 %s268, %s270
        %s272 = sld [smem:[#allocation5 + %s271]]
        %s273 = scalar_lea.hbm %s2, %s272
        %s274 = scalar_lea.vmem [#allocation2], 3
        %s275 = scalar_lea.sflag [#allocation3], 3
        // Predicated region
        $region45: #{tpu_custom_call.1} parent=27 // pred_check
          _
        $region46: #{tpu_custom_call.1} parent=27 // pred_check_branch
          %277 = sbr.rel target = $region48
        $region47: #{tpu_custom_call.1} parent=27 // pred_region
          %278 = sst [smem:[#allocation13]] [#allocation20]
          %279 = sst [smem:[#allocation14]] [#allocation19]
        $region48: #{tpu_custom_call.1} parent=27 // pred_fallthru
          _
        %281 = shalt.err (0)
        %s283 = sshll.u32 %s273, 4
        %s284 = int_to_ptr.hbm [resolvable:$true] %s283
        %s285 = sshll.u32 %s274, 4
        %s286 = int_to_ptr.vmem [resolvable:$true] %s285
        %288 = dma.hbm_to_vmem [thread:$0]  %s284, 16, %s286, %s275
        %s289 = sadd.s32 %s191, 4
        %s290 = sshra.s32 %s289, 7
        %s291 = sand.u32 %s289, 127
        %s292 = sadd.s32 %s290, %s39
        %s293 = smul.u32 %s292, 128
        %s294 = sshra.s32 %s289, 7
        %s295 = sand.u32 %s289, 127
        %s296 = sadd.s32 %s293, %s295
        %s297 = sld [smem:[#allocation5 + %s296]]
        %s298 = scalar_lea.hbm %s2, %s297
        %s299 = scalar_lea.vmem [#allocation2], 4
        %s300 = scalar_lea.sflag [#allocation3], 4
        // Predicated region
        $region49: #{tpu_custom_call.1} parent=27 // pred_check
          _
        $region50: #{tpu_custom_call.1} parent=27 // pred_check_branch
          %302 = sbr.rel target = $region52
        $region51: #{tpu_custom_call.1} parent=27 // pred_region
          %303 = sst [smem:[#allocation13]] [#allocation22]
          %304 = sst [smem:[#allocation14]] [#allocation21]
        $region52: #{tpu_custom_call.1} parent=27 // pred_fallthru
          _
        %306 = shalt.err (0)
        %s308 = sshll.u32 %s298, 4
        %s309 = int_to_ptr.hbm [resolvable:$true] %s308
        %s310 = sshll.u32 %s299, 4
        %s311 = int_to_ptr.vmem [resolvable:$true] %s310
        %313 = dma.hbm_to_vmem [thread:$0]  %s309, 16, %s311, %s300
        %s314 = sadd.s32 %s191, 5
        %s315 = sshra.s32 %s314, 7
        %s316 = sand.u32 %s314, 127
        %s317 = sadd.s32 %s315, %s39
        %s318 = smul.u32 %s317, 128
        %s319 = sshra.s32 %s314, 7
        %s320 = sand.u32 %s314, 127
        %s321 = sadd.s32 %s318, %s320
        %s322 = sld [smem:[#allocation5 + %s321]]
        %s323 = scalar_lea.hbm %s2, %s322
        %s324 = scalar_lea.vmem [#allocation2], 5
        %s325 = scalar_lea.sflag [#allocation3], 5
        // Predicated region
        $region53: #{tpu_custom_call.1} parent=27 // pred_check
          _
        $region54: #{tpu_custom_call.1} parent=27 // pred_check_branch
          %327 = sbr.rel target = $region56
        $region55: #{tpu_custom_call.1} parent=27 // pred_region
          %328 = sst [smem:[#allocation13]] [#allocation24]
          %329 = sst [smem:[#allocation14]] [#allocation23]
        $region56: #{tpu_custom_call.1} parent=27 // pred_fallthru
          _
        %331 = shalt.err (0)
        %s333 = sshll.u32 %s323, 4
        %s334 = int_to_ptr.hbm [resolvable:$true] %s333
        %s335 = sshll.u32 %s324, 4
        %s336 = int_to_ptr.vmem [resolvable:$true] %s335
        %338 = dma.hbm_to_vmem [thread:$0]  %s334, 16, %s336, %s325
        %s339 = sadd.s32 %s191, 6
        %s340 = sshra.s32 %s339, 7
        %s341 = sand.u32 %s339, 127
        %s342 = sadd.s32 %s340, %s39
        %s343 = smul.u32 %s342, 128
        %s344 = sshra.s32 %s339, 7
        %s345 = sand.u32 %s339, 127
        %s346 = sadd.s32 %s343, %s345
        %s347 = sld [smem:[#allocation5 + %s346]]
        %s348 = scalar_lea.hbm %s2, %s347
        %s349 = scalar_lea.vmem [#allocation2], 6
        %s350 = scalar_lea.sflag [#allocation3], 6
        // Predicated region
        $region57: #{tpu_custom_call.1} parent=27 // pred_check
          _
        $region58: #{tpu_custom_call.1} parent=27 // pred_check_branch
          %352 = sbr.rel target = $region60
        $region59: #{tpu_custom_call.1} parent=27 // pred_region
          %353 = sst [smem:[#allocation13]] [#allocation26]
          %354 = sst [smem:[#allocation14]] [#allocation25]
        $region60: #{tpu_custom_call.1} parent=27 // pred_fallthru
          _
        %356 = shalt.err (0)
        %s358 = sshll.u32 %s348, 4
        %s359 = int_to_ptr.hbm [resolvable:$true] %s358
        %s360 = sshll.u32 %s349, 4
        %s361 = int_to_ptr.vmem [resolvable:$true] %s360
        %363 = dma.hbm_to_vmem [thread:$0]  %s359, 16, %s361, %s350
        %s364 = sadd.s32 %s191, 7
        %s365 = sshra.s32 %s364, 7
        %s366 = sand.u32 %s364, 127
        %s367 = sadd.s32 %s365, %s39
        %s368 = smul.u32 %s367, 128
        %s369 = sshra.s32 %s364, 7
        %s370 = sand.u32 %s364, 127
        %s371 = sadd.s32 %s368, %s370
        %s372 = sld [smem:[#allocation5 + %s371]]
        %s373 = scalar_lea.hbm %s2, %s372
        %s374 = scalar_lea.vmem [#allocation2], 7
        %s375 = scalar_lea.sflag [#allocation3], 7
        // Predicated region
        $region61: #{tpu_custom_call.1} parent=27 // pred_check
          _
        $region62: #{tpu_custom_call.1} parent=27 // pred_check_branch
          %377 = sbr.rel target = $region64
        $region63: #{tpu_custom_call.1} parent=27 // pred_region
          %378 = sst [smem:[#allocation13]] [#allocation28]
          %379 = sst [smem:[#allocation14]] [#allocation27]
        $region64: #{tpu_custom_call.1} parent=27 // pred_fallthru
          _
        %381 = shalt.err (0)
        %s383 = sshll.u32 %s373, 4
        %s384 = int_to_ptr.hbm [resolvable:$true] %s383
        %s385 = sshll.u32 %s374, 4
        %s386 = int_to_ptr.vmem [resolvable:$true] %s385
        %388 = dma.hbm_to_vmem [thread:$0]  %s384, 16, %s386, %s375
        %s389 = smul.u32 1, 1
        %s390 = sshll.u32 %s389, 4
        %391 = dma.done [#allocation3], %s390
        %s392 = sshll.u32 %s389, 4
        %393 = dma.done %s225, %s392
        %s394 = sshll.u32 %s389, 4
        %395 = dma.done %s250, %s394
        %s396 = sshll.u32 %s389, 4
        %397 = dma.done %s275, %s396
        %s398 = sshll.u32 %s389, 4
        %399 = dma.done %s300, %s398
        %s400 = sshll.u32 %s389, 4
        %401 = dma.done %s325, %s400
        %s402 = sshll.u32 %s389, 4
        %403 = dma.done %s350, %s402
        %s404 = sshll.u32 %s389, 4
        %405 = dma.done %s375, %s404
        %v406 = vld [vmem:[#allocation2] sm:$0xff]
        %v407 = vld [vmem:[%s169] sm:$0xff]
        %v408 = vadd.f32 %v406, %v407
        %s409 = sld [smem:[#allocation6 + %s198]]
        %s410 = scalar_lea.vmem %s4, %s409
        %v411 = vld [vmem:[%s410] sm:$0x1]
        %v412 = vadd.f32 %v408, %v411
        %413 = vst [vmem:[%s190] sm:$0x1] %v412
        %s414 = sld [smem:[#allocation6 + %s221]]
        %s415 = scalar_lea.vmem %s4, %s414
        %v416 = vld [vmem:[%s415] sm:$0x1]
        %v418 = vrot.slane %v416, 7
        %v420 = vadd.f32 %v408, %v418
        %421 = vst [vmem:[%s190] sm:$0x2] %v420
        %s422 = sld [smem:[#allocation6 + %s246]]
        %s423 = scalar_lea.vmem %s4, %s422
        %v424 = vld [vmem:[%s423] sm:$0x1]
        %v426 = vrot.slane %v424, 6
        %v428 = vadd.f32 %v408, %v426
        %429 = vst [vmem:[%s190] sm:$0x4] %v428
        %s430 = sld [smem:[#allocation6 + %s271]]
        %s431 = scalar_lea.vmem %s4, %s430
        %v432 = vld [vmem:[%s431] sm:$0x1]
        %v434 = vrot.slane %v432, 5
        %v436 = vadd.f32 %v408, %v434
        %437 = vst [vmem:[%s190] sm:$0x8] %v436
        %s438 = sld [smem:[#allocation6 + %s296]]
        %s439 = scalar_lea.vmem %s4, %s438
        %v440 = vld [vmem:[%s439] sm:$0x1]
        %v442 = vrot.slane %v440, 4
        %v444 = vadd.f32 %v408, %v442
        %445 = vst [vmem:[%s190] sm:$0x10] %v444
        %s446 = sld [smem:[#allocation6 + %s321]]
        %s447 = scalar_lea.vmem %s4, %s446
        %v448 = vld [vmem:[%s447] sm:$0x1]
        %v450 = vrot.slane %v448, 3
        %v452 = vadd.f32 %v408, %v450
        %453 = vst [vmem:[%s190] sm:$0x20] %v452
        %s454 = sld [smem:[#allocation6 + %s346]]
        %s455 = scalar_lea.vmem %s4, %s454
        %v456 = vld [vmem:[%s455] sm:$0x1]
        %v458 = vrot.slane %v456, 2
        %v460 = vadd.f32 %v408, %v458
        %461 = vst [vmem:[%s190] sm:$0x40] %v460
        %s462 = sld [smem:[#allocation6 + %s371]]
        %s463 = scalar_lea.vmem %s4, %s462
        %v464 = vld [vmem:[%s463] sm:$0x1]
        %v466 = vrot.slane %v464, 1
        %v468 = vadd.f32 %v408, %v466
        %469 = vst [vmem:[%s190] sm:$0x80] %v468
        %s470 = sand.u32 %s104, 1
        %s471 = scalar_lea.sflag [#allocation9], %s470
        %s472 = sand.u32 %s104, 1
        %s473 = smul.addr %s472, 8
        %s474 = scalar_lea.vmem [#allocation10], %s473
        // Predicated region
        $region65: #{tpu_custom_call.1} parent=27 // pred_check
          %p475 = pneg %p114
        $region66: #{tpu_custom_call.1} parent=27 // pred_check_branch
          %477 = sbr.rel (%p475) target = $region68
        $region67: #{tpu_custom_call.1} parent=27 // pred_region
          %479 = vsyncadd %s471, 0
          %s480 = smul.addr %s39, 2
          %s481 = sadd.s32 %s40, %s480
          %s482 = smul.addr %s481, 8
          %s483 = scalar_lea.hbm %s5, %s482
          %s485 = sshll.u32 %s474, 4
          %s486 = int_to_ptr.vmem [resolvable:$true] %s485
          %s487 = sshll.u32 %s483, 4
          %s488 = int_to_ptr.hbm [resolvable:$true] %s487
          %490 = dma.vmem_to_hbm [thread:$0]  %s486, 128, %s488, %s471
        $region68: #{tpu_custom_call.1} parent=27 // pred_fallthru
          _
      $region28: #{tpu_custom_call.1} parent=5 // pred_fallthru
        _
      %p491 = scmp.le.s32.totalorder 2, %s30
      // Predicated region
      $region69: #{tpu_custom_call.1} parent=5 // pred_check
        %p492 = pneg %p491
      $region70: #{tpu_custom_call.1} parent=5 // pred_check_branch
        %494 = sbr.rel (%p492) target = $region72
      $region71: #{tpu_custom_call.1} parent=5 // pred_region
        %s495 = ssub.s32 %s30, 2
        // Predicated region
        $region73: #{tpu_custom_call.1} parent=71 // pred_check
          %p496 = pneg %p120
        $region74: #{tpu_custom_call.1} parent=71 // pred_check_branch
          %498 = sbr.rel (%p496) target = $region76
        $region75: #{tpu_custom_call.1} parent=71 // pred_region
          %s499 = sand.u32 %s105, 1
          %s500 = scalar_lea.sflag [#allocation9], %s499
          %s501 = sand.u32 %s105, 1
          %s502 = smul.addr %s501, 8
          %s503 = scalar_lea.vmem [#allocation10], %s502
          %505 = dma.done %s500, 128
        $region76: #{tpu_custom_call.1} parent=71 // pred_fallthru
          _
      $region72: #{tpu_custom_call.1} parent=5 // pred_fallthru
        _
    $region6: #{tpu_custom_call.1} parent=1 // loop_footer
      %s34 = sadd.s32 1, %s30
    $region7: #{tpu_custom_call.1} parent=1 // loop_footer_branch
      %29 = sbr.rel target = $region3
    $region8: #{tpu_custom_call.1} parent=1 // loop_exit
      _
    %506 = vsyncpa [#allocation8], 1
    %s507 = scalar_lea.sflag [#allocation8], 1
    %508 = vsyncpa %s507, 1
    %509 = vsyncpa [#allocation9], 1
    %s510 = scalar_lea.sflag [#allocation9], 1
    %511 = vsyncpa %s510, 1
  %512 = vsyncmov [#allocation3]
  %s513 = vpop.sfrf %512
  %p514 = scmp.eq.s32.totalorder %s513, 0
  %p515 = pneg %p514
  %517 = shalt.err (%p515)
  %s518 = scalar_lea.sflag [#allocation3], 1
  %519 = vsyncmov %s518
  %s520 = vpop.sfrf %519
  %p521 = scmp.eq.s32.totalorder %s520, 0
  %p522 = pneg %p521
  %524 = shalt.err (%p522)
  %s525 = scalar_lea.sflag [#allocation3], 2
  %526 = vsyncmov %s525
  %s527 = vpop.sfrf %526
  %p528 = scmp.eq.s32.totalorder %s527, 0
  %p529 = pneg %p528
  %531 = shalt.err (%p529)
  %s532 = scalar_lea.sflag [#allocation3], 3
  %533 = vsyncmov %s532
  %s534 = vpop.sfrf %533
  %p535 = scmp.eq.s32.totalorder %s534, 0
  %p536 = pneg %p535
  %538 = shalt.err (%p536)
  %s539 = scalar_lea.sflag [#allocation3], 4
  %540 = vsyncmov %s539
  %s541 = vpop.sfrf %540
  %p542 = scmp.eq.s32.totalorder %s541, 0
  %p543 = pneg %p542
  %545 = shalt.err (%p543)
  %s546 = scalar_lea.sflag [#allocation3], 5
  %547 = vsyncmov %s546
  %s548 = vpop.sfrf %547
  %p549 = scmp.eq.s32.totalorder %s548, 0
  %p550 = pneg %p549
  %552 = shalt.err (%p550)
  %s553 = scalar_lea.sflag [#allocation3], 6
  %554 = vsyncmov %s553
  %s555 = vpop.sfrf %554
  %p556 = scmp.eq.s32.totalorder %s555, 0
  %p557 = pneg %p556
  %559 = shalt.err (%p557)
  %s560 = scalar_lea.sflag [#allocation3], 7
  %561 = vsyncmov %s560
  %s562 = vpop.sfrf %561
  %p563 = scmp.eq.s32.totalorder %s562, 0
  %p564 = pneg %p563
  %566 = shalt.err (%p564)

</llo_original>
